<compile_context>
chip_gen: v7x
topology: tpu7x:2x2x1
jax: 0.10.0
libtpu: 0.0.40
codegen_flags: <defaults>
</compile_context>

<pallas_src>
import functools

import jax
import jax.numpy as jnp
from jax import lax
from jax.experimental import pallas as pl
from jax.experimental.pallas import tpu as pltpu

# reduction op codes (match the PyTorch module's REDOP_MAP)
O_MEAN, O_SUM, O_MIN, O_MAX = 0, 1, 2, 3


def _round_up(x: int, m: int) -> int:
    return ((x + m - 1) // m) * m


def _cdiv(a: int, b: int) -> int:
    return -(-a // b)


def _pair_reduce(a, b, reduction_op):
    """Reduce two same-shape feature blocks with one of {mean, sum, min, max}."""
    if reduction_op == O_MEAN:
        if jnp.issubdtype(a.dtype, jnp.floating):
            half = jnp.asarray(0.5, dtype=a.dtype)
            return a * half + b * half       # scale-before-add: no fp16/bf16 overflow
        # overflow-safe integer floor-mean: floor((a+b)/2) without widening.
        return (a // 2) + (b // 2) + (a & b & 1)
    if reduction_op == O_SUM:
        return a + b
    if reduction_op == O_MIN:
        return jnp.minimum(a, b)
    if reduction_op == O_MAX:
        return jnp.maximum(a, b)
    raise ValueError(f"unsupported reduction_op {reduction_op}")


def _write_block(o_ref, r, *, i, tile, valid_rows, n_data_blocks, mask_needed):
    """Store a reduced block, zeroing tail rows only on the boundary block."""
    if mask_needed:
        @pl.when(i == n_data_blocks - 1)
        def _():
            # Boundary block: rows >= valid_rows hold stale VMEM (partial input
            # DMA) and map to out_alignment padding -> force zeros.  This is the
            # ONLY place stale input rows can reach the output; every other
            # configuration either fully covers the input or drops the rows via
            # a partial output block.
            row = lax.broadcasted_iota(jnp.int32, r.shape, 0) + i * tile
            o_ref[...] = jnp.where(row < valid_rows, r, jnp.zeros_like(r))

        @pl.when(i != n_data_blocks - 1)
        def _():
            o_ref[...] = r
    else:
        o_ref[...] = r


def _split_reduce_kernel(x_ref, o_ref, *, d, tile, valid_rows, n_data_blocks,
                         has_pad_blocks, mask_needed, reduction_op):
    """Generic path.  x_ref: (tile, 2*d) rows [a_p | b_p]; o_ref: (tile, d)."""
    i = pl.program_id(0)

    def _compute():
        x = x_ref[...]
        r = _pair_reduce(x[:, :d], x[:, d:], reduction_op)
        _write_block(o_ref, r, i=i, tile=tile, valid_rows=valid_rows,
                     n_data_blocks=n_data_blocks, mask_needed=mask_needed)

    if has_pad_blocks:
        @pl.when(i >= n_data_blocks)
        def _():                      # pure-pad block: store-only, no load/reduce
            o_ref[...] = jnp.zeros_like(o_ref)

        pl.when(i < n_data_blocks)(_compute)
    else:
        _compute()


def _packed64_reduce_kernel(x_ref, o_ref, *, d, tile, valid_rows, n_data_blocks,
                            has_pad_blocks, mask_needed, reduction_op):
    """Lane-dense path for d == 64 (two pairs packed per row).

    x_ref : (tile, 256) rows [a_{2q}(64) b_{2q}(64) a_{2q+1}(64) b_{2q+1}(64)]
    o_ref : (tile, 128) rows [r_{2q}(64) | r_{2q+1}(64)]
    """
    i = pl.program_id(0)

    def _compute():
        x = x_ref[...]                                  # (tile, 256)
        xl = x[:, :2 * d]                               # [a_{2q} | b_{2q}]   (128-aligned)
        xh = x[:, 2 * d:]                               # [a_{2q+1} | b_{2q+1}]
        # Rolling a 128-lane row by exactly 64 swaps its halves; the permutation
        # is identical for either roll-sign convention and the reductions are
        # commutative, so this is convention-safe.  XLU is otherwise idle here.
        rl = _pair_reduce(xl, pltpu.roll(xl, shift=d, axis=1), reduction_op)
        rh = _pair_reduce(xh, pltpu.roll(xh, shift=d, axis=1), reduction_op)
        lane = lax.broadcasted_iota(jnp.int32, rl.shape, 1)
        r = jnp.where(lane < d, rl, rh)                 # [r_{2q} | r_{2q+1}]
        _write_block(o_ref, r, i=i, tile=tile, valid_rows=valid_rows,
                     n_data_blocks=n_data_blocks, mask_needed=mask_needed)

    if has_pad_blocks:
        @pl.when(i >= n_data_blocks)
        def _():
            o_ref[...] = jnp.zeros_like(o_ref)

        pl.when(i < n_data_blocks)(_compute)
    else:
        _compute()


def subbuck_reduce_pallas(input_feat: jax.Array, reduction_op: int,
                          reduced_n: int, *,
                          vmem_step_budget_bytes: int = 6 * 1024 * 1024,
                          min_pallas_pairs: int = 256) -> jax.Array:
    """input_feat: (total_N, d) -> (reduced_n, d); rows >= total_N//2 are zero."""
    total_n, d = input_feat.shape
    assert total_n % 2 == 0, "total_N must be even for subbuck_size=2"
    n_pairs = total_n // 2
    assert reduced_n >= n_pairs
    dtype = input_feat.dtype
    itemsize = jnp.dtype(dtype).itemsize
    # native sublane granule per dtype: (8,128) f32 / (16,128) bf16 / (32,128) i8
    granule = {4: 8, 2: 16, 1: 32}.get(itemsize, 8)

    # Tiny inputs are latency-dominated: a Pallas grid buys nothing and the
    # out_alignment zero-fill would otherwise run at tiny tiles.
    if n_pairs < max(min_pallas_pairs, granule):
        pairs = input_feat.reshape(n_pairs, 2, d)
        red = _pair_reduce(pairs[:, 0, :], pairs[:, 1, :], reduction_op)
        return jnp.zeros((reduced_n, d), dtype).at[:n_pairs].set(red)

    use_packed64 = (d == 64) and (n_pairs % 2 == 0) and (reduced_n % 2 == 0)

    if use_packed64:
        x_in = input_feat.reshape(n_pairs // 2, 4 * d)   # (P, 256), free reshape
        in_cols, out_cols = 4 * d, 2 * d                 # 256 in, 128 out (lane-dense)
        valid_rows, out_rows = n_pairs // 2, reduced_n // 2
    else:
        x_in = input_feat.reshape(n_pairs, 2 * d)        # row p = [feat(2p) | feat(2p+1)]
        in_cols, out_cols = 2 * d, d
        valid_rows, out_rows = n_pairs, reduced_n

    # Single-step VMEM budget (Pallas double-buffers -> ~2x actual use; keep
    # <= ~12-14 MiB total so the same tiling fits v7x's 64 MiB VMEM).
    row_bytes = (_round_up(in_cols, 128) + _round_up(out_cols, 128)) * itemsize
    tile = max(granule, (vmem_step_budget_bytes // row_bytes) // granule * granule)
    tile = min(tile, _round_up(valid_rows, granule))

    grid_blocks = _cdiv(out_rows, tile)
    n_data_blocks = _cdiv(valid_rows, tile)
    has_pad_blocks = grid_blocks > n_data_blocks
    # Boundary masking is only needed when the last data block both over-reads
    # the input (valid_rows % tile != 0) and its extra rows land inside the
    # padded output range.
    mask_needed = (valid_rows < out_rows) and (valid_rows % tile != 0)

    if has_pad_blocks:
        # Clamp pad blocks onto the last data block so their input block index
        # never changes -> Pallas skips the re-DMA for every pad step.
        in_map = lambda i, _last=n_data_blocks - 1: (jnp.minimum(i, _last), 0)
    else:
        in_map = lambda i: (i, 0)

    common = dict(d=d, tile=tile, valid_rows=valid_rows,
                  n_data_blocks=n_data_blocks, has_pad_blocks=has_pad_blocks,
                  mask_needed=mask_needed, reduction_op=reduction_op)
    body = _packed64_reduce_kernel if use_packed64 else _split_reduce_kernel
    kernel = functools.partial(body, **common)

    out = pl.pallas_call(
        kernel,
        out_shape=jax.ShapeDtypeStruct((out_rows, out_cols), dtype),
        grid_spec=pltpu.PrefetchScalarGridSpec(
            num_scalar_prefetch=0,
            grid=(grid_blocks,),
            in_specs=[pl.BlockSpec((tile, in_cols), in_map)],
            out_specs=pl.BlockSpec((tile, out_cols), lambda i: (i, 0)),
        ),
        compiler_params=pltpu.CompilerParams(
            dimension_semantics=("parallel",),
            vmem_limit_bytes=32 * 1024 * 1024,
        ),
    )(x_in)

    if use_packed64:
        out = out.reshape(reduced_n, d)                  # free contiguous reshape
    return out


class InbucketPoolingLayer:
    """JAX/Pallas port of flash3dxfmr InbucketPoolingLayer (forward only)."""

    REDOP_MAP = {"mean": 0, "sum": 1, "min": 2, "max": 3}

    def __init__(self, reduction_op, out_alignment=1024, subbuck_size=2):
        assert subbuck_size == 2, (
            f"Currently only subbuck_size=2 is supported, input is {subbuck_size}")
        if isinstance(reduction_op, int):
            self.reduction_op = reduction_op
        elif isinstance(reduction_op, str):
            assert reduction_op in self.REDOP_MAP, (
                f"Unsupported reduction op name:{reduction_op}")
            self.reduction_op = self.REDOP_MAP[reduction_op]
        else:
            raise TypeError("reduction_op must be int or str")
        self.out_align = out_alignment
        self.subbuck_size = subbuck_size

    def __call__(self, coords, input_feat, seps):
        total_n, d = input_feat.shape
        assert total_n % 2 == 0, "total_N must be even for subbuck_size=2"
        n_pairs = total_n // 2
        reduced_n = _round_up(n_pairs, self.out_align)
        pad = reduced_n - n_pairs

        # ---- hot path: pairwise feature reduction (padding fused in-kernel) ----
        reduced_feat = subbuck_reduce_pallas(input_feat, self.reduction_op, reduced_n)

        # ---- glue (tiny aux buffers), plain JAX ----
        cdim = coords.shape[-1]
        rep_coord = coords.reshape(n_pairs, 2, cdim)[:, 0, :]
        reduced_coord = jnp.pad(rep_coord, ((0, pad), (0, 0))) if pad else rep_coord

        # TODO(synk): assumes every per-instance length is even (as does the
        # consecutive pairing); otherwise a subbucket would straddle instances.
        reduced_sep = seps // 2

        rows = jnp.arange(reduced_n, dtype=jnp.uint32)
        unpool_ind = jnp.stack([rows * 2, rows * 2 + 1], axis=1)
        if pad:
            unpool_ind = jnp.where(rows[:, None] < jnp.uint32(n_pairs),
                                   unpool_ind, jnp.uint32(0xFFFFFFFF))
        return reduced_coord, reduced_sep, reduced_feat, unpool_ind


if __name__ == "__main__":
    key = jax.random.PRNGKey(0)
    k1, k2, k3, k4 = jax.random.split(key, 4)

    # Case A: d=64 -> lane-dense packed kernel, fused out_alignment padding.
    total_n, d = 1024, 64
    n_pairs = total_n // 2
    coords = jax.random.uniform(k1, (total_n, 3), dtype=jnp.float32) * 10.0
    feat = jax.random.normal(k2, (total_n, d), dtype=jnp.float32)
    seps = jnp.array([total_n // 2, total_n], dtype=jnp.int32)
    layer = InbucketPoolingLayer("mean", out_alignment=1024)
    rc, rs, rf, ui = layer(coords, feat, seps)
    jax.block_until_ready(rf)
    ref = jnp.mean(feat.reshape(n_pairs, 2, d), axis=1)
    assert rf.shape == (1024, d)
    assert rc.shape == (1024, 3)
    assert rs.shape == (2,)
    assert ui.shape == (1024, 2) and ui.dtype == jnp.uint32
    assert jnp.allclose(rf[:n_pairs], ref, atol=1e-5)
    assert jnp.all(rf[n_pairs:] == 0)
    assert jnp.all(ui[n_pairs:] == jnp.uint32(0xFFFFFFFF))

    # Case B: d=128 -> generic path, lane-aligned split, no padding.
    total_n, d = 1024, 128
    n_pairs = total_n // 2
    coords = jax.random.uniform(k1, (total_n, 3), dtype=jnp.float32)
    feat = jax.random.normal(k3, (total_n, d), dtype=jnp.float32)
    seps = jnp.array([total_n], dtype=jnp.int32)
    layer = InbucketPoolingLayer("max", out_alignment=8)
    rc, rs, rf, ui = layer(coords, feat, seps)
    jax.block_until_ready(rf)
    ref = jnp.max(feat.reshape(n_pairs, 2, d), axis=1)
    assert rf.shape == (n_pairs, d)
    assert jnp.allclose(rf, ref)

    # Case C: d=32, n_pairs=318 -> generic path, boundary mask + pure-pad blocks.
    total_n, d = 636, 32
    n_pairs = total_n // 2
    coords = jax.random.uniform(k2, (total_n, 3), dtype=jnp.float32)
    feat = jax.random.normal(k4, (total_n, d), dtype=jnp.float32)
    seps = jnp.array([318, total_n], dtype=jnp.int32)
    layer = InbucketPoolingLayer("min", out_alignment=1024)
    rc, rs, rf, ui = layer(coords, feat, seps)
    jax.block_until_ready(rf)
    ref = jnp.min(feat.reshape(n_pairs, 2, d), axis=1)
    assert rf.shape == (1024, d)
    assert jnp.allclose(rf[:n_pairs], ref)
    assert jnp.all(rf[n_pairs:] == 0)

    # Case D: tiny input -> jnp fallback path.
    total_n, d = 16, 16
    n_pairs = total_n // 2
    coords = jax.random.uniform(k3, (total_n, 3), dtype=jnp.float32)
    feat = jax.random.normal(k2, (total_n, d), dtype=jnp.float32)
    seps = jnp.array([total_n], dtype=jnp.int32)
    layer = InbucketPoolingLayer("sum", out_alignment=8)
    rc, rs, rf, ui = layer(coords, feat, seps)
    jax.block_until_ready(rf)
    ref = jnp.sum(feat.reshape(n_pairs, 2, d), axis=1)
    assert rf.shape == (8, d)
    assert jnp.allclose(rf, ref)

    print("KERNEL_OK")
</pallas_src>

<mosaic_0001>
module attributes {stable_mosaic.version = 11 : i64} {
  func.func @_packed64_reduce_kernel(%arg0: i32, %arg1: memref<256x256xf32, #tpu.memory_space<vmem>>, %arg2: memref<256x128xf32, #tpu.memory_space<vmem>>) attributes {dimension_semantics = [#tpu.dimension_semantics<parallel>], iteration_bounds = array<i64: 2>, scalar_prefetch = 0 : i64, scratch_operands = 0 : i64, tpu.core_type = #tpu.core_type<tc>, window_params = [{transform_indices = @transform_0, window_bounds = array<i64: 256, 256>}, {transform_indices = @transform_1, window_bounds = array<i64: 256, 128>}]} {
    %c1_i32 = arith.constant 1 : i32
    %0 = arith.cmpi sge, %arg0, %c1_i32 : i32
    %1 = arith.extui %0 : i1 to i32
    %c0_i32 = arith.constant 0 : i32
    %2 = arith.cmpi ne, %1, %c0_i32 : i32
    scf.if %2 {
      %cst = arith.constant 0.000000e+00 : f32
      %6 = vector.broadcast %cst : f32 to vector<256x128xf32>
      %c0 = arith.constant 0 : index
      %c0_2 = arith.constant 0 : index
      %7 = vector.load %arg2[%c0, %c0_2] : memref<256x128xf32, #tpu.memory_space<vmem>>, vector<256x128xf32>
      tpu.vector_store %arg2[%c0, %c0_2], %6 {strides = array<i32>} : memref<256x128xf32, #tpu.memory_space<vmem>>, vector<256x128xf32>,
    } else {
    }
    %c1_i32_0 = arith.constant 1 : i32
    %3 = arith.cmpi slt, %arg0, %c1_i32_0 : i32
    %4 = arith.extui %3 : i1 to i32
    %c0_i32_1 = arith.constant 0 : i32
    %5 = arith.cmpi ne, %4, %c0_i32_1 : i32
    scf.if %5 {
      %c0 = arith.constant 0 : index
      %c0_2 = arith.constant 0 : index
      %6 = vector.load %arg1[%c0, %c0_2] : memref<256x256xf32, #tpu.memory_space<vmem>>, vector<256x256xf32>
      %7 = vector.extract_strided_slice %6 {offsets = [0, 0], sizes = [256, 128], strides = [1, 1]} : vector<256x256xf32> to vector<256x128xf32>
      %8 = vector.extract_strided_slice %6 {offsets = [0, 128], sizes = [256, 128], strides = [1, 1]} : vector<256x256xf32> to vector<256x128xf32>
      %c64_i32 = arith.constant 64 : i32
      %9 = tpu.dynamic_rotate %7 by %c64_i32 dim 1 : vector<256x128xf32>, i32 -> vector<256x128xf32>
      %cst = arith.constant 5.000000e-01 : f32
      %10 = vector.broadcast %cst : f32 to vector<256x128xf32>
      %11 = arith.mulf %7, %10 : vector<256x128xf32>
      %cst_3 = arith.constant 5.000000e-01 : f32
      %12 = vector.broadcast %cst_3 : f32 to vector<256x128xf32>
      %13 = arith.mulf %9, %12 : vector<256x128xf32>
      %14 = arith.addf %11, %13 : vector<256x128xf32>
      %c64_i32_4 = arith.constant 64 : i32
      %15 = tpu.dynamic_rotate %8 by %c64_i32_4 dim 1 : vector<256x128xf32>, i32 -> vector<256x128xf32>
      %cst_5 = arith.constant 5.000000e-01 : f32
      %16 = vector.broadcast %cst_5 : f32 to vector<256x128xf32>
      %17 = arith.mulf %8, %16 : vector<256x128xf32>
      %cst_6 = arith.constant 5.000000e-01 : f32
      %18 = vector.broadcast %cst_6 : f32 to vector<256x128xf32>
      %19 = arith.mulf %15, %18 : vector<256x128xf32>
      %20 = arith.addf %17, %19 : vector<256x128xf32>
      %21 = tpu.iota {dimensions = array<i32: 1>} : vector<256x128xi32>
      %c64_i32_7 = arith.constant 64 : i32
      %22 = vector.broadcast %c64_i32_7 : i32 to vector<256x128xi32>
      %23 = arith.cmpi slt, %21, %22 : vector<256x128xi32>
      %24 = arith.select %23, %14, %20 : vector<256x128xi1>, vector<256x128xf32>
      %c0_8 = arith.constant 0 : index
      %c0_9 = arith.constant 0 : index
      %25 = vector.load %arg2[%c0_8, %c0_9] : memref<256x128xf32, #tpu.memory_space<vmem>>, vector<256x128xf32>
      tpu.vector_store %arg2[%c0_8, %c0_9], %24 {strides = array<i32>} : memref<256x128xf32, #tpu.memory_space<vmem>>, vector<256x128xf32>,
    } else {
    }
    return
  }
  func.func @transform_0(%arg0: i32) -> (i32, i32) {
    %c0_i32 = arith.constant 0 : i32
    %0 = arith.minsi %arg0, %c0_i32 : i32
    %c0_i32_0 = arith.constant 0 : i32
    %c0_i32_1 = arith.constant 0 : i32
    return %0, %c0_i32_0 : i32, i32
  }
  func.func @transform_1(%arg0: i32) -> (i32, i32) {
    %c0_i32 = arith.constant 0 : i32
    %c0_i32_0 = arith.constant 0 : i32
    return %arg0, %c0_i32 : i32, i32
  }
}

</mosaic_0001>

<llo_original>
// kernel: tpu_custom_call.1
$region0: #{tpu_custom_call.1}
  #allocation0 [shape = 'u32[]', space=smem, size = 0x4, offset = 0x4, fixed_abs, tag = 'smem constant byte address 0x4 - core index']
  #allocation1 [shape = 'u32[144,128]{1,0:T(1,128)}', space=vmem, size = 0x12000, scoped, tag = 'internal scratch']
  %s0 = inlined_call_operand.hbm [shape: f32[256,256], index: 0, kind: input, shape index: {}]
  %s1 = inlined_call_operand.hbm [shape: f32[512,128], index: 1, kind: output, shape index: {}]
  %s2 = sld [smem:[#allocation0]]
  $region49: #{tpu_custom_call.1} parent=0
    _
  %s4 = ssub.s32 1, %s2
  %s5 = scalar_select 0, %s4, %s2
  $region1: #{tpu_custom_call.1} parent=0
    #allocation2 [shape = 'u8[524288]{0}', space=vmem, size = 0x80000, scoped, tag = 'input window, operand 0']
    #allocation3 [shape = 's32[2]{0}', space=sflag, size = 0x8, scoped, tag = 'scoped memory for tpu_custom_call.1']
    #allocation4 [shape = 's32[2]{0}', space=sflag, size = 0x8, scoped, tag = 'scoped memory for tpu_custom_call.1']
    #allocation5 [shape = 'u8[262144]{0}', space=vmem, size = 0x40000, scoped, tag = 'output window, operand 0']
    %6 = vsyncpa [#allocation3], 0
    %s7 = scalar_lea.sflag [#allocation3], 1
    %8 = vsyncpa %s7, 0
    %9 = vsyncpa [#allocation4], 0
    %s10 = scalar_lea.sflag [#allocation4], 1
    %11 = vsyncpa %s10, 0
    loop: start=0, step=1, limit=4
    $region2: #{tpu_custom_call.1} parent=1 // loop_pre_header
      _
    $region3: #{tpu_custom_call.1} parent=1 // loop_header
      %s13 = sphi 0, %s17
      %p14 = scmp.ge.s32.totalorder %s13, 4
      %s27 = sphi 0, %s29
      %s30 = sphi 0, %s27
      %s31 = sphi 0, %s30
      %s47 = sphi 0, %s31
      %s53 = sphi 0, %s55
      %s56 = sphi 0, %s53
      %s57 = sphi 0, %s56
      %s73 = sphi 0, %s57
    $region4: #{tpu_custom_call.1} parent=1 // loop_header_branch
      %16 = sbr.rel (%p14) target = $region8
    $region5: #{tpu_custom_call.1} parent=1 // loop_body
      %s18 = ssub.s32 %s13, 1
      %s19 = ssub.s32 %s13, 2
      %s20 = sadd.s32 %s13, 1
      %p21 = scmp.lt.s32.totalorder %s13, 0
      %s22 = scalar_select %p21, %s13, 0
      %p23 = scmp.lt.s32.totalorder %s20, 0
      %s24 = scalar_select %p23, %s20, 0
      %s25 = ssub.s32 %s22, %s24
      %p26 = scmp.eq.s32.totalorder %s25, 0
      %s28 = sadd.s32 %s27, 1
      %s29 = scalar_select %p26, %s27, %s28
      %p32 = pneg %p26
      %p33 = scmp.eq.s32.totalorder %s13, 1
      %p34 = por %p32, %p33
      %p35 = scmp.ne.s32.totalorder %s27, %s30
      %p36 = scmp.eq.s32.totalorder %s13, 0
      %p37 = por %p35, %p36
      %p38 = scmp.ne.s32.totalorder %s27, %s30
      %p39 = scmp.eq.s32.totalorder %s18, 1
      %p40 = por %p38, %p39
      %p41 = scmp.ne.s32.totalorder %s30, %s31
      %p42 = scmp.eq.s32.totalorder %s18, 0
      %p43 = por %p41, %p42
      %p44 = scmp.ne.s32.totalorder %s30, %s31
      %p45 = scmp.eq.s32.totalorder %s19, 1
      %p46 = por %p44, %p45
      %p48 = scmp.ne.s32.totalorder %s31, %s47
      %p49 = scmp.eq.s32.totalorder %s19, 0
      %p50 = por %p48, %p49
      %s51 = ssub.s32 %s13, %s20
      %p52 = scmp.eq.s32.totalorder %s51, 0
      %s54 = sadd.s32 %s53, 1
      %s55 = scalar_select %p52, %s53, %s54
      %p58 = pneg %p52
      %p59 = scmp.eq.s32.totalorder %s13, 1
      %p60 = por %p58, %p59
      %p61 = scmp.ne.s32.totalorder %s53, %s56
      %p62 = scmp.eq.s32.totalorder %s13, 0
      %p63 = por %p61, %p62
      %p64 = scmp.ne.s32.totalorder %s53, %s56
      %p65 = scmp.eq.s32.totalorder %s18, 1
      %p66 = por %p64, %p65
      %p67 = scmp.ne.s32.totalorder %s56, %s57
      %p68 = scmp.eq.s32.totalorder %s18, 0
      %p69 = por %p67, %p68
      %p70 = scmp.ne.s32.totalorder %s56, %s57
      %p71 = scmp.eq.s32.totalorder %s19, 1
      %p72 = por %p70, %p71
      %p74 = scmp.ne.s32.totalorder %s57, %s73
      %p75 = scmp.eq.s32.totalorder %s19, 0
      %p76 = por %p74, %p75
      %p77 = scmp.le.s32.totalorder 1, %s13
      %p78 = scmp.lt.s32.totalorder %s13, 3
      %p79 = pnand %p77, %p78
      %p80 = pneg %p79
      // Predicated region
      $region9: #{tpu_custom_call.1} parent=5 // pred_check
        _
      $region10: #{tpu_custom_call.1} parent=5 // pred_check_branch
        %82 = sbr.rel (%p79) target = $region12
      $region11: #{tpu_custom_call.1} parent=5 // pred_region
        %s83 = ssub.s32 %s13, 1
      $region12: #{tpu_custom_call.1} parent=5 // pred_fallthru
        _
      %p84 = scmp.lt.s32.totalorder %s13, 2
      // Predicated region
      $region13: #{tpu_custom_call.1} parent=5 // pred_check
        %p85 = pneg %p84
      $region14: #{tpu_custom_call.1} parent=5 // pred_check_branch
        %87 = sbr.rel (%p85) target = $region16
      $region15: #{tpu_custom_call.1} parent=5 // pred_region
        // Predicated region
        $region17: #{tpu_custom_call.1} parent=15 // pred_check
          %p88 = pneg %p37
        $region18: #{tpu_custom_call.1} parent=15 // pred_check_branch
          %90 = sbr.rel (%p88) target = $region20
        $region19: #{tpu_custom_call.1} parent=15 // pred_region
          %s91 = sand.u32 %s27, 1
          %s92 = scalar_lea.sflag [#allocation3], %s91
          %s93 = sand.u32 %s27, 1
          %s94 = smul.addr %s93, 512
          %s95 = scalar_lea.vmem [#allocation2], %s94
          %p96 = scmp.lt.s32.totalorder %s13, 0
          %s97 = scalar_select %p96, %s13, 0
          %s98 = smul.u32 32, %s97
          %s100 = ssub.s32 8192, 8192
          %101 = vsyncadd %s92, %s100
          %s102 = smul.addr %s98, 2
          %s103 = smul.addr %s102, 128
          %s104 = scalar_lea.hbm %s0, %s103
          %s105 = sshll.u32 %s95, 4
          %s106 = int_to_ptr.vmem [resolvable:$true] %s105
          %111 = dma.hbm_to_vmem [thread:$0]  %s104, 8192, %s106, %s92, 256, 256, 16
        $region20: #{tpu_custom_call.1} parent=15 // pred_fallthru
          _
      $region16: #{tpu_custom_call.1} parent=5 // pred_fallthru
        _
      %p112 = scmp.le.s32.totalorder 1, %s13
      %p113 = scmp.lt.s32.totalorder %s13, 3
      %p114 = pnand %p112, %p113
      %p115 = pneg %p114
      // Predicated region
      $region21: #{tpu_custom_call.1} parent=5 // pred_check
        _
      $region22: #{tpu_custom_call.1} parent=5 // pred_check_branch
        %117 = sbr.rel (%p114) target = $region24
      $region23: #{tpu_custom_call.1} parent=5 // pred_region
        %s118 = ssub.s32 %s13, 1
        %s119 = sand.u32 %s30, 1
        %s120 = scalar_lea.sflag [#allocation3], %s119
        %s121 = sand.u32 %s30, 1
        %s122 = smul.addr %s121, 512
        %s123 = scalar_lea.vmem [#allocation2], %s122
        // Predicated region
        $region25: #{tpu_custom_call.1} parent=23 // pred_check
          %p124 = pneg %p43
        $region26: #{tpu_custom_call.1} parent=23 // pred_check_branch
          %126 = sbr.rel (%p124) target = $region28
        $region27: #{tpu_custom_call.1} parent=23 // pred_region
          %127 = dma.done %s120, 8192
        $region28: #{tpu_custom_call.1} parent=23 // pred_fallthru
          _
        %s128 = sand.u32 %s30, 1
        %s129 = scalar_lea.sflag [#allocation3], %s128
        %s130 = sand.u32 %s30, 1
        %s131 = smul.addr %s130, 512
        %s132 = scalar_lea.vmem [#allocation2], %s131
        %p133 = pneg %p43
        %p134 = pneg %p40
        %p135 = pneg %p69
        %p136 = pneg %p66
        %s137 = sand.u32 %s56, 1
        %s138 = scalar_lea.sflag [#allocation4], %s137
        %s139 = sand.u32 %s56, 1
        %s140 = smul.addr %s139, 256
        %s141 = scalar_lea.vmem [#allocation5], %s140
        %p142 = scmp.lt.s32.totalorder %s18, 0
        %s143 = scalar_select %p142, %s18, 0
        %s144 = smul.u32 32, %s143
        %s145 = smul.u32 32, %s18
        %p146 = scmp.ge.s32.totalorder %s18, 1
        // Predicated region
        $region29: #{tpu_custom_call.1} parent=23 // pred_check
          %p147 = pneg %p146
        $region30: #{tpu_custom_call.1} parent=23 // pred_check_branch
          %149 = sbr.rel (%p147) target = $region32
        $region31: #{tpu_custom_call.1} parent=23 // pred_region
          %150 = vst [vmem:[%s141] sm:$0xff] 0.0
          %151 = vst [vmem:[%s141 + $0x8] sm:$0xff] 0.0
          %152 = vst [vmem:[%s141 + $0x10] sm:$0xff] 0.0
          %153 = vst [vmem:[%s141 + $0x18] sm:$0xff] 0.0
          %154 = vst [vmem:[%s141 + $0x20] sm:$0xff] 0.0
          %155 = vst [vmem:[%s141 + $0x28] sm:$0xff] 0.0
          %156 = vst [vmem:[%s141 + $0x30] sm:$0xff] 0.0
          %157 = vst [vmem:[%s141 + $0x38] sm:$0xff] 0.0
          %158 = vst [vmem:[%s141 + $0x40] sm:$0xff] 0.0
          %159 = vst [vmem:[%s141 + $0x48] sm:$0xff] 0.0
          %160 = vst [vmem:[%s141 + $0x50] sm:$0xff] 0.0
          %161 = vst [vmem:[%s141 + $0x58] sm:$0xff] 0.0
          %162 = vst [vmem:[%s141 + $0x60] sm:$0xff] 0.0
          %163 = vst [vmem:[%s141 + $0x68] sm:$0xff] 0.0
          %164 = vst [vmem:[%s141 + $0x70] sm:$0xff] 0.0
          %165 = vst [vmem:[%s141 + $0x78] sm:$0xff] 0.0
          %166 = vst [vmem:[%s141 + $0x80] sm:$0xff] 0.0
          %167 = vst [vmem:[%s141 + $0x88] sm:$0xff] 0.0
          %168 = vst [vmem:[%s141 + $0x90] sm:$0xff] 0.0
          %169 = vst [vmem:[%s141 + $0x98] sm:$0xff] 0.0
          %170 = vst [vmem:[%s141 + $0xa0] sm:$0xff] 0.0
          %171 = vst [vmem:[%s141 + $0xa8] sm:$0xff] 0.0
          %172 = vst [vmem:[%s141 + $0xb0] sm:$0xff] 0.0
          %173 = vst [vmem:[%s141 + $0xb8] sm:$0xff] 0.0
          %174 = vst [vmem:[%s141 + $0xc0] sm:$0xff] 0.0
          %175 = vst [vmem:[%s141 + $0xc8] sm:$0xff] 0.0
          %176 = vst [vmem:[%s141 + $0xd0] sm:$0xff] 0.0
          %177 = vst [vmem:[%s141 + $0xd8] sm:$0xff] 0.0
          %178 = vst [vmem:[%s141 + $0xe0] sm:$0xff] 0.0
          %179 = vst [vmem:[%s141 + $0xe8] sm:$0xff] 0.0
          %180 = vst [vmem:[%s141 + $0xf0] sm:$0xff] 0.0
          %181 = vst [vmem:[%s141 + $0xf8] sm:$0xff] 0.0
        $region32: #{tpu_custom_call.1} parent=23 // pred_fallthru
          _
        %p182 = scmp.lt.s32.totalorder %s18, 1
        // Predicated region
        $region33: #{tpu_custom_call.1} parent=23 // pred_check
          %p183 = pneg %p182
        $region34: #{tpu_custom_call.1} parent=23 // pred_check_branch
          %185 = sbr.rel (%p183) target = $region36
        $region35: #{tpu_custom_call.1} parent=23 // pred_region
          %v186 = vld [vmem:[%s123] sm:$0xff]
          %v187 = vld [vmem:[%s123 + $0x8] sm:$0xff]
          %v188 = vld [vmem:[%s123 + $0x10] sm:$0xff]
          %v189 = vld [vmem:[%s123 + $0x18] sm:$0xff]
          %v190 = vld [vmem:[%s123 + $0x20] sm:$0xff]
          %v191 = vld [vmem:[%s123 + $0x28] sm:$0xff]
          %v192 = vld [vmem:[%s123 + $0x30] sm:$0xff]
          %v193 = vld [vmem:[%s123 + $0x38] sm:$0xff]
          %v194 = vld [vmem:[%s123 + $0x40] sm:$0xff]
          %v195 = vld [vmem:[%s123 + $0x48] sm:$0xff]
          %v196 = vld [vmem:[%s123 + $0x50] sm:$0xff]
          %v197 = vld [vmem:[%s123 + $0x58] sm:$0xff]
          %v198 = vld [vmem:[%s123 + $0x60] sm:$0xff]
          %v199 = vld [vmem:[%s123 + $0x68] sm:$0xff]
          %v200 = vld [vmem:[%s123 + $0x70] sm:$0xff]
          %v201 = vld [vmem:[%s123 + $0x78] sm:$0xff]
          %v202 = vld [vmem:[%s123 + $0x80] sm:$0xff]
          %v203 = vld [vmem:[%s123 + $0x88] sm:$0xff]
          %v204 = vld [vmem:[%s123 + $0x90] sm:$0xff]
          %v205 = vld [vmem:[%s123 + $0x98] sm:$0xff]
          %v206 = vld [vmem:[%s123 + $0xa0] sm:$0xff]
          %v207 = vld [vmem:[%s123 + $0xa8] sm:$0xff]
          %v208 = vld [vmem:[%s123 + $0xb0] sm:$0xff]
          %v209 = vld [vmem:[%s123 + $0xb8] sm:$0xff]
          %v210 = vld [vmem:[%s123 + $0xc0] sm:$0xff]
          %v211 = vld [vmem:[%s123 + $0xc8] sm:$0xff]
          %v212 = vld [vmem:[%s123 + $0xd0] sm:$0xff]
          %v213 = vld [vmem:[%s123 + $0xd8] sm:$0xff]
          %v214 = vld [vmem:[%s123 + $0xe0] sm:$0xff]
          %v215 = vld [vmem:[%s123 + $0xe8] sm:$0xff]
          %v216 = vld [vmem:[%s123 + $0xf0] sm:$0xff]
          %v217 = vld [vmem:[%s123 + $0xf8] sm:$0xff]
          %v218 = vld [vmem:[%s123 + $0x100] sm:$0xff]
          %v219 = vld [vmem:[%s123 + $0x108] sm:$0xff]
          %v220 = vld [vmem:[%s123 + $0x110] sm:$0xff]
          %v221 = vld [vmem:[%s123 + $0x118] sm:$0xff]
          %v222 = vld [vmem:[%s123 + $0x120] sm:$0xff]
          %v223 = vld [vmem:[%s123 + $0x128] sm:$0xff]
          %v224 = vld [vmem:[%s123 + $0x130] sm:$0xff]
          %v225 = vld [vmem:[%s123 + $0x138] sm:$0xff]
          %v226 = vld [vmem:[%s123 + $0x140] sm:$0xff]
          %v227 = vld [vmem:[%s123 + $0x148] sm:$0xff]
          %v228 = vld [vmem:[%s123 + $0x150] sm:$0xff]
          %v229 = vld [vmem:[%s123 + $0x158] sm:$0xff]
          %v230 = vld [vmem:[%s123 + $0x160] sm:$0xff]
          %v231 = vld [vmem:[%s123 + $0x168] sm:$0xff]
          %v232 = vld [vmem:[%s123 + $0x170] sm:$0xff]
          %v233 = vld [vmem:[%s123 + $0x178] sm:$0xff]
          %v234 = vld [vmem:[%s123 + $0x180] sm:$0xff]
          %v235 = vld [vmem:[%s123 + $0x188] sm:$0xff]
          %v236 = vld [vmem:[%s123 + $0x190] sm:$0xff]
          %v237 = vld [vmem:[%s123 + $0x198] sm:$0xff]
          %v238 = vld [vmem:[%s123 + $0x1a0] sm:$0xff]
          %v239 = vld [vmem:[%s123 + $0x1a8] sm:$0xff]
          %v240 = vld [vmem:[%s123 + $0x1b0] sm:$0xff]
          %v241 = vld [vmem:[%s123 + $0x1b8] sm:$0xff]
          %v242 = vld [vmem:[%s123 + $0x1c0] sm:$0xff]
          %v243 = vld [vmem:[%s123 + $0x1c8] sm:$0xff]
          %v244 = vld [vmem:[%s123 + $0x1d0] sm:$0xff]
          %v245 = vld [vmem:[%s123 + $0x1d8] sm:$0xff]
          %v246 = vld [vmem:[%s123 + $0x1e0] sm:$0xff]
          %v247 = vld [vmem:[%s123 + $0x1e8] sm:$0xff]
          %v248 = vld [vmem:[%s123 + $0x1f0] sm:$0xff]
          %v249 = vld [vmem:[%s123 + $0x1f8] sm:$0xff]
          %250 = vrot.lane.b32.xlu0 %v186, 64
          %v251 = vpop.permute.xlu0 %250
          %252 = vrot.lane.b32.xlu0 %v188, 64
          %v253 = vpop.permute.xlu0 %252
          %254 = vrot.lane.b32.xlu0 %v190, 64
          %v255 = vpop.permute.xlu0 %254
          %256 = vrot.lane.b32.xlu0 %v192, 64
          %v257 = vpop.permute.xlu0 %256
          %258 = vrot.lane.b32.xlu0 %v194, 64
          %v259 = vpop.permute.xlu0 %258
          %260 = vrot.lane.b32.xlu0 %v196, 64
          %v261 = vpop.permute.xlu0 %260
          %262 = vrot.lane.b32.xlu0 %v198, 64
          %v263 = vpop.permute.xlu0 %262
          %264 = vrot.lane.b32.xlu0 %v200, 64
          %v265 = vpop.permute.xlu0 %264
          %266 = vrot.lane.b32.xlu0 %v202, 64
          %v267 = vpop.permute.xlu0 %266
          %268 = vrot.lane.b32.xlu0 %v204, 64
          %v269 = vpop.permute.xlu0 %268
          %270 = vrot.lane.b32.xlu0 %v206, 64
          %v271 = vpop.permute.xlu0 %270
          %272 = vrot.lane.b32.xlu0 %v208, 64
          %v273 = vpop.permute.xlu0 %272
          %274 = vrot.lane.b32.xlu0 %v210, 64
          %v275 = vpop.permute.xlu0 %274
          %276 = vrot.lane.b32.xlu0 %v212, 64
          %v277 = vpop.permute.xlu0 %276
          %278 = vrot.lane.b32.xlu0 %v214, 64
          %v279 = vpop.permute.xlu0 %278
          %280 = vrot.lane.b32.xlu0 %v216, 64
          %v281 = vpop.permute.xlu0 %280
          %282 = vrot.lane.b32.xlu0 %v218, 64
          %v283 = vpop.permute.xlu0 %282
          %284 = vrot.lane.b32.xlu0 %v220, 64
          %v285 = vpop.permute.xlu0 %284
          %286 = vrot.lane.b32.xlu0 %v222, 64
          %v287 = vpop.permute.xlu0 %286
          %288 = vrot.lane.b32.xlu0 %v224, 64
          %v289 = vpop.permute.xlu0 %288
          %290 = vrot.lane.b32.xlu0 %v226, 64
          %v291 = vpop.permute.xlu0 %290
          %292 = vrot.lane.b32.xlu0 %v228, 64
          %v293 = vpop.permute.xlu0 %292
          %294 = vrot.lane.b32.xlu0 %v230, 64
          %v295 = vpop.permute.xlu0 %294
          %296 = vrot.lane.b32.xlu0 %v232, 64
          %v297 = vpop.permute.xlu0 %296
          %298 = vrot.lane.b32.xlu0 %v234, 64
          %v299 = vpop.permute.xlu0 %298
          %300 = vrot.lane.b32.xlu0 %v236, 64
          %v301 = vpop.permute.xlu0 %300
          %302 = vrot.lane.b32.xlu0 %v238, 64
          %v303 = vpop.permute.xlu0 %302
          %304 = vrot.lane.b32.xlu0 %v240, 64
          %v305 = vpop.permute.xlu0 %304
          %306 = vrot.lane.b32.xlu0 %v242, 64
          %v307 = vpop.permute.xlu0 %306
          %308 = vrot.lane.b32.xlu0 %v244, 64
          %v309 = vpop.permute.xlu0 %308
          %310 = vrot.lane.b32.xlu0 %v246, 64
          %v311 = vpop.permute.xlu0 %310
          %312 = vrot.lane.b32.xlu0 %v248, 64
          %v313 = vpop.permute.xlu0 %312
          %v314 = vmul.f32 %v186, 0.5
          %v315 = vmul.f32 %v188, 0.5
          %v316 = vmul.f32 %v190, 0.5
          %v317 = vmul.f32 %v192, 0.5
          %v318 = vmul.f32 %v194, 0.5
          %v319 = vmul.f32 %v196, 0.5
          %v320 = vmul.f32 %v198, 0.5
          %v321 = vmul.f32 %v200, 0.5
          %v322 = vmul.f32 %v202, 0.5
          %v323 = vmul.f32 %v204, 0.5
          %v324 = vmul.f32 %v206, 0.5
          %v325 = vmul.f32 %v208, 0.5
          %v326 = vmul.f32 %v210, 0.5
          %v327 = vmul.f32 %v212, 0.5
          %v328 = vmul.f32 %v214, 0.5
          %v329 = vmul.f32 %v216, 0.5
          %v330 = vmul.f32 %v218, 0.5
          %v331 = vmul.f32 %v220, 0.5
          %v332 = vmul.f32 %v222, 0.5
          %v333 = vmul.f32 %v224, 0.5
          %v334 = vmul.f32 %v226, 0.5
          %v335 = vmul.f32 %v228, 0.5
          %v336 = vmul.f32 %v230, 0.5
          %v337 = vmul.f32 %v232, 0.5
          %v338 = vmul.f32 %v234, 0.5
          %v339 = vmul.f32 %v236, 0.5
          %v340 = vmul.f32 %v238, 0.5
          %v341 = vmul.f32 %v240, 0.5
          %v342 = vmul.f32 %v242, 0.5
          %v343 = vmul.f32 %v244, 0.5
          %v344 = vmul.f32 %v246, 0.5
          %v345 = vmul.f32 %v248, 0.5
          %v346 = vmul.f32 %v251, 0.5
          %v347 = vmul.f32 %v253, 0.5
          %v348 = vmul.f32 %v255, 0.5
          %v349 = vmul.f32 %v257, 0.5
          %v350 = vmul.f32 %v259, 0.5
          %v351 = vmul.f32 %v261, 0.5
          %v352 = vmul.f32 %v263, 0.5
          %v353 = vmul.f32 %v265, 0.5
          %v354 = vmul.f32 %v267, 0.5
          %v355 = vmul.f32 %v269, 0.5
          %v356 = vmul.f32 %v271, 0.5
          %v357 = vmul.f32 %v273, 0.5
          %v358 = vmul.f32 %v275, 0.5
          %v359 = vmul.f32 %v277, 0.5
          %v360 = vmul.f32 %v279, 0.5
          %v361 = vmul.f32 %v281, 0.5
          %v362 = vmul.f32 %v283, 0.5
          %v363 = vmul.f32 %v285, 0.5
          %v364 = vmul.f32 %v287, 0.5
          %v365 = vmul.f32 %v289, 0.5
          %v366 = vmul.f32 %v291, 0.5
          %v367 = vmul.f32 %v293, 0.5
          %v368 = vmul.f32 %v295, 0.5
          %v369 = vmul.f32 %v297, 0.5
          %v370 = vmul.f32 %v299, 0.5
          %v371 = vmul.f32 %v301, 0.5
          %v372 = vmul.f32 %v303, 0.5
          %v373 = vmul.f32 %v305, 0.5
          %v374 = vmul.f32 %v307, 0.5
          %v375 = vmul.f32 %v309, 0.5
          %v376 = vmul.f32 %v311, 0.5
          %v377 = vmul.f32 %v313, 0.5
          %v378 = vadd.f32 %v314, %v346
          %v379 = vadd.f32 %v315, %v347
          %v380 = vadd.f32 %v316, %v348
          %v381 = vadd.f32 %v317, %v349
          %v382 = vadd.f32 %v318, %v350
          %v383 = vadd.f32 %v319, %v351
          %v384 = vadd.f32 %v320, %v352
          %v385 = vadd.f32 %v321, %v353
          %v386 = vadd.f32 %v322, %v354
          %v387 = vadd.f32 %v323, %v355
          %v388 = vadd.f32 %v324, %v356
          %v389 = vadd.f32 %v325, %v357
          %v390 = vadd.f32 %v326, %v358
          %v391 = vadd.f32 %v327, %v359
          %v392 = vadd.f32 %v328, %v360
          %v393 = vadd.f32 %v329, %v361
          %v394 = vadd.f32 %v330, %v362
          %v395 = vadd.f32 %v331, %v363
          %v396 = vadd.f32 %v332, %v364
          %v397 = vadd.f32 %v333, %v365
          %v398 = vadd.f32 %v334, %v366
          %v399 = vadd.f32 %v335, %v367
          %v400 = vadd.f32 %v336, %v368
          %v401 = vadd.f32 %v337, %v369
          %v402 = vadd.f32 %v338, %v370
          %v403 = vadd.f32 %v339, %v371
          %v404 = vadd.f32 %v340, %v372
          %v405 = vadd.f32 %v341, %v373
          %v406 = vadd.f32 %v342, %v374
          %v407 = vadd.f32 %v343, %v375
          %v408 = vadd.f32 %v344, %v376
          %v409 = vadd.f32 %v345, %v377
          %410 = vrot.lane.b32.xlu0 %v187, 64
          %v411 = vpop.permute.xlu0 %410
          %412 = vrot.lane.b32.xlu0 %v189, 64
          %v413 = vpop.permute.xlu0 %412
          %414 = vrot.lane.b32.xlu0 %v191, 64
          %v415 = vpop.permute.xlu0 %414
          %416 = vrot.lane.b32.xlu0 %v193, 64
          %v417 = vpop.permute.xlu0 %416
          %418 = vrot.lane.b32.xlu0 %v195, 64
          %v419 = vpop.permute.xlu0 %418
          %420 = vrot.lane.b32.xlu0 %v197, 64
          %v421 = vpop.permute.xlu0 %420
          %422 = vrot.lane.b32.xlu0 %v199, 64
          %v423 = vpop.permute.xlu0 %422
          %424 = vrot.lane.b32.xlu0 %v201, 64
          %v425 = vpop.permute.xlu0 %424
          %426 = vrot.lane.b32.xlu0 %v203, 64
          %v427 = vpop.permute.xlu0 %426
          %428 = vrot.lane.b32.xlu0 %v205, 64
          %v429 = vpop.permute.xlu0 %428
          %430 = vrot.lane.b32.xlu0 %v207, 64
          %v431 = vpop.permute.xlu0 %430
          %432 = vrot.lane.b32.xlu0 %v209, 64
          %v433 = vpop.permute.xlu0 %432
          %434 = vrot.lane.b32.xlu0 %v211, 64
          %v435 = vpop.permute.xlu0 %434
          %436 = vrot.lane.b32.xlu0 %v213, 64
          %v437 = vpop.permute.xlu0 %436
          %438 = vrot.lane.b32.xlu0 %v215, 64
          %v439 = vpop.permute.xlu0 %438
          %440 = vrot.lane.b32.xlu0 %v217, 64
          %v441 = vpop.permute.xlu0 %440
          %442 = vrot.lane.b32.xlu0 %v219, 64
          %v443 = vpop.permute.xlu0 %442
          %444 = vrot.lane.b32.xlu0 %v221, 64
          %v445 = vpop.permute.xlu0 %444
          %446 = vrot.lane.b32.xlu0 %v223, 64
          %v447 = vpop.permute.xlu0 %446
          %448 = vrot.lane.b32.xlu0 %v225, 64
          %v449 = vpop.permute.xlu0 %448
          %450 = vrot.lane.b32.xlu0 %v227, 64
          %v451 = vpop.permute.xlu0 %450
          %452 = vrot.lane.b32.xlu0 %v229, 64
          %v453 = vpop.permute.xlu0 %452
          %454 = vrot.lane.b32.xlu0 %v231, 64
          %v455 = vpop.permute.xlu0 %454
          %456 = vrot.lane.b32.xlu0 %v233, 64
          %v457 = vpop.permute.xlu0 %456
          %458 = vrot.lane.b32.xlu0 %v235, 64
          %v459 = vpop.permute.xlu0 %458
          %460 = vrot.lane.b32.xlu0 %v237, 64
          %v461 = vpop.permute.xlu0 %460
          %462 = vrot.lane.b32.xlu0 %v239, 64
          %v463 = vpop.permute.xlu0 %462
          %464 = vrot.lane.b32.xlu0 %v241, 64
          %v465 = vpop.permute.xlu0 %464
          %466 = vrot.lane.b32.xlu0 %v243, 64
          %v467 = vpop.permute.xlu0 %466
          %468 = vrot.lane.b32.xlu0 %v245, 64
          %v469 = vpop.permute.xlu0 %468
          %470 = vrot.lane.b32.xlu0 %v247, 64
          %v471 = vpop.permute.xlu0 %470
          %472 = vrot.lane.b32.xlu0 %v249, 64
          %v473 = vpop.permute.xlu0 %472
          %v474 = vmul.f32 %v187, 0.5
          %v475 = vmul.f32 %v189, 0.5
          %v476 = vmul.f32 %v191, 0.5
          %v477 = vmul.f32 %v193, 0.5
          %v478 = vmul.f32 %v195, 0.5
          %v479 = vmul.f32 %v197, 0.5
          %v480 = vmul.f32 %v199, 0.5
          %v481 = vmul.f32 %v201, 0.5
          %v482 = vmul.f32 %v203, 0.5
          %v483 = vmul.f32 %v205, 0.5
          %v484 = vmul.f32 %v207, 0.5
          %v485 = vmul.f32 %v209, 0.5
          %v486 = vmul.f32 %v211, 0.5
          %v487 = vmul.f32 %v213, 0.5
          %v488 = vmul.f32 %v215, 0.5
          %v489 = vmul.f32 %v217, 0.5
          %v490 = vmul.f32 %v219, 0.5
          %v491 = vmul.f32 %v221, 0.5
          %v492 = vmul.f32 %v223, 0.5
          %v493 = vmul.f32 %v225, 0.5
          %v494 = vmul.f32 %v227, 0.5
          %v495 = vmul.f32 %v229, 0.5
          %v496 = vmul.f32 %v231, 0.5
          %v497 = vmul.f32 %v233, 0.5
          %v498 = vmul.f32 %v235, 0.5
          %v499 = vmul.f32 %v237, 0.5
          %v500 = vmul.f32 %v239, 0.5
          %v501 = vmul.f32 %v241, 0.5
          %v502 = vmul.f32 %v243, 0.5
          %v503 = vmul.f32 %v245, 0.5
          %v504 = vmul.f32 %v247, 0.5
          %v505 = vmul.f32 %v249, 0.5
          %v506 = vmul.f32 %v411, 0.5
          %v507 = vmul.f32 %v413, 0.5
          %v508 = vmul.f32 %v415, 0.5
          %v509 = vmul.f32 %v417, 0.5
          %v510 = vmul.f32 %v419, 0.5
          %v511 = vmul.f32 %v421, 0.5
          %v512 = vmul.f32 %v423, 0.5
          %v513 = vmul.f32 %v425, 0.5
          %v514 = vmul.f32 %v427, 0.5
          %v515 = vmul.f32 %v429, 0.5
          %v516 = vmul.f32 %v431, 0.5
          %v517 = vmul.f32 %v433, 0.5
          %v518 = vmul.f32 %v435, 0.5
          %v519 = vmul.f32 %v437, 0.5
          %v520 = vmul.f32 %v439, 0.5
          %v521 = vmul.f32 %v441, 0.5
          %v522 = vmul.f32 %v443, 0.5
          %v523 = vmul.f32 %v445, 0.5
          %v524 = vmul.f32 %v447, 0.5
          %v525 = vmul.f32 %v449, 0.5
          %v526 = vmul.f32 %v451, 0.5
          %v527 = vmul.f32 %v453, 0.5
          %v528 = vmul.f32 %v455, 0.5
          %v529 = vmul.f32 %v457, 0.5
          %v530 = vmul.f32 %v459, 0.5
          %v531 = vmul.f32 %v461, 0.5
          %v532 = vmul.f32 %v463, 0.5
          %v533 = vmul.f32 %v465, 0.5
          %v534 = vmul.f32 %v467, 0.5
          %v535 = vmul.f32 %v469, 0.5
          %v536 = vmul.f32 %v471, 0.5
          %v537 = vmul.f32 %v473, 0.5
          %v538 = vadd.f32 %v474, %v506
          %v539 = vadd.f32 %v475, %v507
          %v540 = vadd.f32 %v476, %v508
          %v541 = vadd.f32 %v477, %v509
          %v542 = vadd.f32 %v478, %v510
          %v543 = vadd.f32 %v479, %v511
          %v544 = vadd.f32 %v480, %v512
          %v545 = vadd.f32 %v481, %v513
          %v546 = vadd.f32 %v482, %v514
          %v547 = vadd.f32 %v483, %v515
          %v548 = vadd.f32 %v484, %v516
          %v549 = vadd.f32 %v485, %v517
          %v550 = vadd.f32 %v486, %v518
          %v551 = vadd.f32 %v487, %v519
          %v552 = vadd.f32 %v488, %v520
          %v553 = vadd.f32 %v489, %v521
          %v554 = vadd.f32 %v490, %v522
          %v555 = vadd.f32 %v491, %v523
          %v556 = vadd.f32 %v492, %v524
          %v557 = vadd.f32 %v493, %v525
          %v558 = vadd.f32 %v494, %v526
          %v559 = vadd.f32 %v495, %v527
          %v560 = vadd.f32 %v496, %v528
          %v561 = vadd.f32 %v497, %v529
          %v562 = vadd.f32 %v498, %v530
          %v563 = vadd.f32 %v499, %v531
          %v564 = vadd.f32 %v500, %v532
          %v565 = vadd.f32 %v501, %v533
          %v566 = vadd.f32 %v502, %v534
          %v567 = vadd.f32 %v503, %v535
          %v568 = vadd.f32 %v504, %v536
          %v569 = vadd.f32 %v505, %v537
          %v570 = vlaneseq
          %v571 = vand.u32 %v570, 127
          %vm572 = vcmp.lt.s32.totalorder %v571, 64
          %v573 = vsel %vm572, %v378, %v538
          %v574 = vsel %vm572, %v379, %v539
          %v575 = vsel %vm572, %v380, %v540
          %v576 = vsel %vm572, %v381, %v541
          %v577 = vsel %vm572, %v382, %v542
          %v578 = vsel %vm572, %v383, %v543
          %v579 = vsel %vm572, %v384, %v544
          %v580 = vsel %vm572, %v385, %v545
          %v581 = vsel %vm572, %v386, %v546
          %v582 = vsel %vm572, %v387, %v547
          %v583 = vsel %vm572, %v388, %v548
          %v584 = vsel %vm572, %v389, %v549
          %v585 = vsel %vm572, %v390, %v550
          %v586 = vsel %vm572, %v391, %v551
          %v587 = vsel %vm572, %v392, %v552
          %v588 = vsel %vm572, %v393, %v553
          %v589 = vsel %vm572, %v394, %v554
          %v590 = vsel %vm572, %v395, %v555
          %v591 = vsel %vm572, %v396, %v556
          %v592 = vsel %vm572, %v397, %v557
          %v593 = vsel %vm572, %v398, %v558
          %v594 = vsel %vm572, %v399, %v559
          %v595 = vsel %vm572, %v400, %v560
          %v596 = vsel %vm572, %v401, %v561
          %v597 = vsel %vm572, %v402, %v562
          %v598 = vsel %vm572, %v403, %v563
          %v599 = vsel %vm572, %v404, %v564
          %v600 = vsel %vm572, %v405, %v565
          %v601 = vsel %vm572, %v406, %v566
          %v602 = vsel %vm572, %v407, %v567
          %v603 = vsel %vm572, %v408, %v568
          %v604 = vsel %vm572, %v409, %v569
          %605 = vst [vmem:[%s141] sm:$0xff] %v573
          %606 = vst [vmem:[%s141 + $0x8] sm:$0xff] %v574
          %607 = vst [vmem:[%s141 + $0x10] sm:$0xff] %v575
          %608 = vst [vmem:[%s141 + $0x18] sm:$0xff] %v576
          %609 = vst [vmem:[%s141 + $0x20] sm:$0xff] %v577
          %610 = vst [vmem:[%s141 + $0x28] sm:$0xff] %v578
          %611 = vst [vmem:[%s141 + $0x30] sm:$0xff] %v579
          %612 = vst [vmem:[%s141 + $0x38] sm:$0xff] %v580
          %613 = vst [vmem:[%s141 + $0x40] sm:$0xff] %v581
          %614 = vst [vmem:[%s141 + $0x48] sm:$0xff] %v582
          %615 = vst [vmem:[%s141 + $0x50] sm:$0xff] %v583
          %616 = vst [vmem:[%s141 + $0x58] sm:$0xff] %v584
          %617 = vst [vmem:[%s141 + $0x60] sm:$0xff] %v585
          %618 = vst [vmem:[%s141 + $0x68] sm:$0xff] %v586
          %619 = vst [vmem:[%s141 + $0x70] sm:$0xff] %v587
          %620 = vst [vmem:[%s141 + $0x78] sm:$0xff] %v588
          %621 = vst [vmem:[%s141 + $0x80] sm:$0xff] %v589
          %622 = vst [vmem:[%s141 + $0x88] sm:$0xff] %v590
          %623 = vst [vmem:[%s141 + $0x90] sm:$0xff] %v591
          %624 = vst [vmem:[%s141 + $0x98] sm:$0xff] %v592
          %625 = vst [vmem:[%s141 + $0xa0] sm:$0xff] %v593
          %626 = vst [vmem:[%s141 + $0xa8] sm:$0xff] %v594
          %627 = vst [vmem:[%s141 + $0xb0] sm:$0xff] %v595
          %628 = vst [vmem:[%s141 + $0xb8] sm:$0xff] %v596
          %629 = vst [vmem:[%s141 + $0xc0] sm:$0xff] %v597
          %630 = vst [vmem:[%s141 + $0xc8] sm:$0xff] %v598
          %631 = vst [vmem:[%s141 + $0xd0] sm:$0xff] %v599
          %632 = vst [vmem:[%s141 + $0xd8] sm:$0xff] %v600
          %633 = vst [vmem:[%s141 + $0xe0] sm:$0xff] %v601
          %634 = vst [vmem:[%s141 + $0xe8] sm:$0xff] %v602
          %635 = vst [vmem:[%s141 + $0xf0] sm:$0xff] %v603
          %636 = vst [vmem:[%s141 + $0xf8] sm:$0xff] %v604
        $region36: #{tpu_custom_call.1} parent=23 // pred_fallthru
          _
        %s637 = sand.u32 %s56, 1
        %s638 = scalar_lea.sflag [#allocation4], %s637
        %s639 = sand.u32 %s56, 1
        %s640 = smul.addr %s639, 256
        %s641 = scalar_lea.vmem [#allocation5], %s640
        // Predicated region
        $region37: #{tpu_custom_call.1} parent=23 // pred_check
          %p642 = pneg %p66
        $region38: #{tpu_custom_call.1} parent=23 // pred_check_branch
          %644 = sbr.rel (%p642) target = $region40
        $region39: #{tpu_custom_call.1} parent=23 // pred_region
          %s645 = smul.u32 32, %s18
          %s647 = ssub.s32 4096, 4096
          %648 = vsyncadd %s638, %s647
          %s649 = smul.addr %s645, 128
          %s650 = scalar_lea.hbm %s1, %s649
          %s651 = sshll.u32 %s641, 4
          %s652 = int_to_ptr.vmem [resolvable:$true] %s651
          %657 = dma.vmem_to_hbm [thread:$0]  %s652, 4096, %s650, %s638, 128, 128, 8
        $region40: #{tpu_custom_call.1} parent=23 // pred_fallthru
          _
      $region24: #{tpu_custom_call.1} parent=5 // pred_fallthru
        _
      %p658 = scmp.le.s32.totalorder 2, %s13
      // Predicated region
      $region41: #{tpu_custom_call.1} parent=5 // pred_check
        %p659 = pneg %p658
      $region42: #{tpu_custom_call.1} parent=5 // pred_check_branch
        %661 = sbr.rel (%p659) target = $region44
      $region43: #{tpu_custom_call.1} parent=5 // pred_region
        %s662 = ssub.s32 %s13, 2
        // Predicated region
        $region45: #{tpu_custom_call.1} parent=43 // pred_check
          %p663 = pneg %p72
        $region46: #{tpu_custom_call.1} parent=43 // pred_check_branch
          %665 = sbr.rel (%p663) target = $region48
        $region47: #{tpu_custom_call.1} parent=43 // pred_region
          %s666 = sand.u32 %s57, 1
          %s667 = scalar_lea.sflag [#allocation4], %s666
          %s668 = sand.u32 %s57, 1
          %s669 = smul.addr %s668, 256
          %s670 = scalar_lea.vmem [#allocation5], %s669
          %671 = dma.done %s667, 4096
        $region48: #{tpu_custom_call.1} parent=43 // pred_fallthru
          _
      $region44: #{tpu_custom_call.1} parent=5 // pred_fallthru
        _
    $region6: #{tpu_custom_call.1} parent=1 // loop_footer
      %s17 = sadd.s32 1, %s13
    $region7: #{tpu_custom_call.1} parent=1 // loop_footer_branch
      %12 = sbr.rel target = $region3
    $region8: #{tpu_custom_call.1} parent=1 // loop_exit
      _
    %672 = vsyncpa [#allocation3], 1
    %s673 = scalar_lea.sflag [#allocation3], 1
    %674 = vsyncpa %s673, 1
    %675 = vsyncpa [#allocation4], 1
    %s676 = scalar_lea.sflag [#allocation4], 1
    %677 = vsyncpa %s676, 1

</llo_original>
